<compile_context>
chip_gen: v7x
topology: tpu7x:2x2x1
jax: 0.10.0
libtpu: 0.0.40
codegen_flags: <defaults>
</compile_context>

<pallas_src>
import functools

import jax
import jax.numpy as jnp
from jax.experimental import pallas as pl
from jax.experimental.pallas import tpu as pltpu


def _rmsnorm_kernel(x_ref, o_ref, *, d, eps):
    # Hot path: per-row L2 norm reduction + broadcast normalize, all in VMEM.
    x = x_ref[...].astype(jnp.float32)
    sq_sum = jnp.sum(x * x, axis=-1, keepdims=True)          # (rows_tile, 1)
    rms = jnp.sqrt(sq_sum) * (float(d) ** -0.5)              # ||x||_2 / sqrt(d)
    # Per-row reciprocal (exact). approx=True would push it to the EUP slot, but the
    # kernel is HBM-bound anyway, so keep full precision.
    inv = pl.reciprocal(rms + eps, approx=False)             # (rows_tile, 1)
    o_ref[...] = (x * inv).astype(o_ref.dtype)                # broadcast multiply


def _choose_block_rows(rows, d):
    """Pick a row-tile so each f32 tile is ~2 MiB (>=85% of HBM roofline per measured
    Pallas data), multiple of 8, and never larger than the array itself."""
    target_bytes = 2 * 1024 * 1024
    br = target_bytes // max(1, d * 4)
    br = max(8, min(2048, br))
    br = (br // 8) * 8                      # sublane multiple
    if br >= rows:
        # One (possibly non-multiple-of-8) block covering the full row dim is legal:
        # block_shape equal to the full array dim satisfies the (8,128) rule.
        return rows
    return br


def simple_rms_norm(x, *, eps=1e-6, block_rows=None):
    """Applies SimpleRMSNorm over the last axis of x."""
    orig_shape = x.shape
    d = orig_shape[-1]
    rows = 1
    for s in orig_shape[:-1]:
        rows *= s
    x2 = x.reshape(rows, d)

    if block_rows is None:
        block_rows = _choose_block_rows(rows, d)
    block_rows = min(block_rows, rows)

    grid = (pl.cdiv(rows, block_rows),)     # partial last block handled by masked writes

    kernel = functools.partial(_rmsnorm_kernel, d=d, eps=eps)
    itemsize = jnp.dtype(x.dtype).itemsize
    cost = pl.CostEstimate(
        flops=3 * rows * d,                 # square, add, multiply
        transcendentals=rows,               # sqrt (+ reciprocal) per row
        bytes_accessed=2 * rows * d * itemsize,
    )

    out = pl.pallas_call(
        kernel,
        out_shape=jax.ShapeDtypeStruct((rows, d), x.dtype),
        grid_spec=pltpu.PrefetchScalarGridSpec(
            num_scalar_prefetch=0,
            grid=grid,
            in_specs=[pl.BlockSpec((block_rows, d), lambda i: (i, 0))],
            out_specs=pl.BlockSpec((block_rows, d), lambda i: (i, 0)),
        ),
        compiler_params=pltpu.CompilerParams(
            dimension_semantics=("parallel",),     # rows are independent -> megacore shard
            vmem_limit_bytes=48 * 1024 * 1024,     # headroom above v5e's 16 MiB scoped default
        ),
        cost_estimate=cost,
    )(x2)

    return out.reshape(orig_shape)


def simple_rms_norm_ref(x, *, eps=1e-6):
    d = x.shape[-1]
    norm_x = jnp.sqrt(jnp.sum(jnp.square(x.astype(jnp.float32)), axis=-1, keepdims=True))
    rms_x = norm_x * (float(d) ** -0.5)
    return (x / (rms_x + eps)).astype(x.dtype)


if __name__ == "__main__":
    key = jax.random.PRNGKey(0)

    # Primary case consistent with the module: (batch, seq, hidden) with d = hidden.
    batch, seq, hidden = 2, 8, 32
    x = jax.random.normal(key, (batch, seq, hidden), dtype=jnp.float32)

    out = jax.block_until_ready(simple_rms_norm(x, eps=1e-6))
    ref = simple_rms_norm_ref(x, eps=1e-6)
    assert out.shape == x.shape and out.dtype == x.dtype
    assert jnp.allclose(out, ref, atol=1e-5, rtol=1e-5), "mismatch vs reference (case 1)"

    # Secondary case: rows not a multiple of block_rows, exercising the partial last block
    # (no jnp.pad / slice round trip in the wrapper anymore).
    x2 = jax.random.normal(jax.random.PRNGKey(0), (1, 1030, 32), dtype=jnp.float32)
    out2 = jax.block_until_ready(simple_rms_norm(x2, eps=1e-6, block_rows=1024))
    ref2 = simple_rms_norm_ref(x2, eps=1e-6)
    assert jnp.allclose(out2, ref2, atol=1e-5, rtol=1e-5), "mismatch vs reference (case 2)"

    print("KERNEL_OK")
</pallas_src>

<mosaic_0001>
module attributes {stable_mosaic.version = 11 : i64} {
  func.func @_rmsnorm_kernel(%arg0: i32, %arg1: memref<16x32xf32, #tpu.memory_space<vmem>>, %arg2: memref<16x32xf32, #tpu.memory_space<vmem>>) attributes {dimension_semantics = [#tpu.dimension_semantics<parallel>], iteration_bounds = array<i64: 1>, scalar_prefetch = 0 : i64, scratch_operands = 0 : i64, tpu.core_type = #tpu.core_type<tc>, window_params = [{transform_indices = @transform_0, window_bounds = array<i64: 16, 32>}, {transform_indices = @transform_1, window_bounds = array<i64: 16, 32>}]} {
    %c0 = arith.constant 0 : index
    %c0_0 = arith.constant 0 : index
    %0 = vector.load %arg1[%c0, %c0_0] : memref<16x32xf32, #tpu.memory_space<vmem>>, vector<16x32xf32>
    %1 = arith.mulf %0, %0 : vector<16x32xf32>
    %cst = arith.constant dense<0.000000e+00> : vector<16xf32>
    %2 = vector.multi_reduction <add>, %1, %cst [1] : vector<16x32xf32> to vector<16xf32>
    %3 = vector.shape_cast %2 : vector<16xf32> to vector<16x1xf32>
    %4 = math.sqrt %3 : vector<16x1xf32>
    %cst_1 = arith.constant 0.176776692 : f32
    %5 = vector.broadcast %cst_1 : f32 to vector<16x1xf32>
    %6 = arith.mulf %4, %5 : vector<16x1xf32>
    %cst_2 = arith.constant 9.99999997E-7 : f32
    %7 = vector.broadcast %cst_2 : f32 to vector<16x1xf32>
    %8 = arith.addf %6, %7 : vector<16x1xf32>
    %9 = tpu.reciprocal %8 : vector<16x1xf32> -> vector<16x1xf32>
    %10 = vector.broadcast %9 : vector<16x1xf32> to vector<16x32xf32>
    %11 = arith.mulf %0, %10 : vector<16x32xf32>
    %c0_3 = arith.constant 0 : index
    %c0_4 = arith.constant 0 : index
    %12 = vector.load %arg2[%c0_3, %c0_4] : memref<16x32xf32, #tpu.memory_space<vmem>>, vector<16x32xf32>
    tpu.vector_store %arg2[%c0_3, %c0_4], %11 {strides = array<i32>} : memref<16x32xf32, #tpu.memory_space<vmem>>, vector<16x32xf32>,
    return
  }
  func.func @transform_0(%arg0: i32) -> (i32, i32) {
    %c0_i32 = arith.constant 0 : i32
    %c0_i32_0 = arith.constant 0 : i32
    return %arg0, %c0_i32 : i32, i32
  }
  func.func @transform_1(%arg0: i32) -> (i32, i32) {
    %c0_i32 = arith.constant 0 : i32
    %c0_i32_0 = arith.constant 0 : i32
    return %arg0, %c0_i32 : i32, i32
  }
}

</mosaic_0001>

<llo_original>
// kernel: tpu_custom_call.1
$region0: #{tpu_custom_call.1}
  #allocation0 [shape = 'u32[]', space=smem, size = 0x4, offset = 0x4, fixed_abs, tag = 'smem constant byte address 0x4 - core index']
  #allocation1 [shape = 'u32[144,128]{1,0:T(1,128)}', space=vmem, size = 0x12000, scoped, tag = 'internal scratch']
  %s0 = inlined_call_operand.hbm [shape: f32[16,32], index: 0, kind: input, shape index: {}]
  %s1 = inlined_call_operand.hbm [shape: f32[16,32], index: 1, kind: output, shape index: {}]
  %s2 = sld [smem:[#allocation0]]
  $region18: #{tpu_custom_call.1} parent=0
    _
  %s4 = ssub.s32 1, %s2
  %s5 = scalar_select 0, %s4, %s2
  $region1: #{tpu_custom_call.1} parent=0
    #allocation2 [shape = 'u8[8192]{0}', space=vmem, size = 0x2000, scoped, tag = 'input window, operand 0, single buffered']
    #allocation3 [shape = 's32[1]{0}', space=sflag, size = 0x4, scoped, tag = 'scoped memory for tpu_custom_call.1']
    #allocation4 [shape = 's32[1]{0}', space=sflag, size = 0x4, scoped, tag = 'scoped memory for tpu_custom_call.1']
    #allocation5 [shape = 'u8[8192]{0}', space=vmem, size = 0x2000, scoped, tag = 'output window, operand 0, single buffered']
    %6 = vsyncpa [#allocation3], 0
    %7 = vsyncpa [#allocation4], 0
    // Predicated region
    $region2: #{tpu_custom_call.1} parent=1 // pred_check
      _
    $region3: #{tpu_custom_call.1} parent=1 // pred_check_branch
      %9 = sbr.rel (0) target = $region5
    $region4: #{tpu_custom_call.1} parent=1 // pred_region
      %s11 = ssub.s32 256, 256
      %12 = vsyncadd [#allocation3], %s11
      %s13 = sshll.u32 [#allocation2], 4
      %s14 = int_to_ptr.vmem [resolvable:$true] %s13
      %19 = dma.hbm_to_vmem [thread:$0]  %s0, 256, %s14, [#allocation3], 128, 128, 8
    $region5: #{tpu_custom_call.1} parent=1 // pred_fallthru
      _
    // Predicated region
    $region6: #{tpu_custom_call.1} parent=1 // pred_check
      _
    $region7: #{tpu_custom_call.1} parent=1 // pred_check_branch
      %21 = sbr.rel (0) target = $region9
    $region8: #{tpu_custom_call.1} parent=1 // pred_region
      %22 = dma.done [#allocation3], 256
    $region9: #{tpu_custom_call.1} parent=1 // pred_fallthru
      _
    %v23 = vld [vmem:[#allocation2] sm:$0xff]
    %v24 = vld [vmem:[#allocation2 + $0x8] sm:$0xff]
    %v25 = vmul.f32 %v23, %v23
    %v26 = vmul.f32 %v24, %v24
    %vm27 = vcmask 261120
    %v28 = vsel %vm27, %v25, 0.0
    %29 = vadd.xlane.f32.xlu0 %v28
    %v30 = vpop.xlane.xlu0 %29
    %v31 = vsel %vm27, %v26, 0.0
    %32 = vadd.xlane.f32.xlu0 %v31
    %v33 = vpop.xlane.xlu0 %32
    %v34 = vrsqrt.pop %v30
    %v35 = vmul.f32 %v30, %v34
    %vm36 = vcmp.eq.f32.partialorder %v30, inf
    %v37 = vsel %vm36, %v30, %v35
    %vm38 = vcmp.eq.f32.partialorder %v30, 0.0
    %v39 = vand.u32 %v30, 2147483648
    %v40 = vsel %vm38, %v39, %v37
    %v41 = vrsqrt.pop %v33
    %v42 = vmul.f32 %v33, %v41
    %vm43 = vcmp.eq.f32.partialorder %v33, inf
    %v44 = vsel %vm43, %v33, %v42
    %vm45 = vcmp.eq.f32.partialorder %v33, 0.0
    %v46 = vand.u32 %v33, 2147483648
    %v47 = vsel %vm45, %v46, %v44
    %v48 = vmul.f32 %v40, 0.17677669
    %v49 = vmul.f32 %v47, 0.17677669
    %v50 = vadd.f32 %v48, 1e-06
    %v51 = vadd.f32 %v49, 1e-06
    %v52 = vrcp.pop %v50
    %v53 = vrcp.pop %v51
    %v54 = vmul.f32 %v23, %v52
    %v55 = vmul.f32 %v24, %v53
    %56 = vst.msk [vmem:[#allocation5] sm:$0xff] %vm27, %v54
    %57 = vst.msk [vmem:[#allocation5 + $0x8] sm:$0xff] %vm27, %v55
    // Predicated region
    $region10: #{tpu_custom_call.1} parent=1 // pred_check
      _
    $region11: #{tpu_custom_call.1} parent=1 // pred_check_branch
      %59 = sbr.rel (0) target = $region13
    $region12: #{tpu_custom_call.1} parent=1 // pred_region
      %s61 = ssub.s32 256, 256
      %62 = vsyncadd [#allocation4], %s61
      %s63 = sshll.u32 [#allocation5], 4
      %s64 = int_to_ptr.vmem [resolvable:$true] %s63
      %69 = dma.vmem_to_hbm [thread:$0]  %s64, 256, %s1, [#allocation4], 128, 128, 8
    $region13: #{tpu_custom_call.1} parent=1 // pred_fallthru
      _
    // Predicated region
    $region14: #{tpu_custom_call.1} parent=1 // pred_check
      _
    $region15: #{tpu_custom_call.1} parent=1 // pred_check_branch
      %71 = sbr.rel (0) target = $region17
    $region16: #{tpu_custom_call.1} parent=1 // pred_region
      %72 = dma.done [#allocation4], 256
    $region17: #{tpu_custom_call.1} parent=1 // pred_fallthru
      _
    %73 = vsyncpa [#allocation3], 1
    %74 = vsyncpa [#allocation4], 1

</llo_original>
